<compile_context>
chip_gen: v7x
topology: tpu7x:2x2x1
jax: 0.10.0
libtpu: 0.0.40
codegen_flags: <defaults>
</compile_context>

<pallas_src>
import functools

import jax
import jax.numpy as jnp
from jax.experimental import pallas as pl
from jax.experimental.pallas import tpu as pltpu


def _round_up(v, m):
    return (v + m - 1) // m * m


def _signed_bounds(bit_width):
    """Signed symmetric integer range for a given bit width (as floats)."""
    return -(2.0 ** (bit_width - 1)), 2.0 ** (bit_width - 1) - 1.0


def _fake_quant_act(v, scale, bit_width):
    """Per-tensor fake quant-dequant (QuantIdentity equivalent)."""
    lo, hi = _signed_bounds(bit_width)
    s = jnp.asarray(scale, jnp.float32)
    return jnp.clip(jnp.round(v * (1.0 / s)), lo, hi) * s


def _vmem_capacity_bytes():
    """Physical per-core VMEM (v5e/v6e: 128 MiB, v7x: 64 MiB); conservative fallback."""
    try:
        return int(pltpu.get_tpu_info().vmem_capacity_bytes)
    except Exception:  # query unavailable -> assume the smallest (v7x) VMEM
        return 64 * 1024 * 1024


def _resident_spec(block_shape, single_buffer):
    """BlockSpec for a block whose index_map is constant across the grid.

    When the block is large, request single-buffering: double-buffering a
    never-changing block only burns VMEM (matters for the resident weight on
    v7x's 64 MiB VMEM and frees budget for bigger batch tiles everywhere).
    """
    index_map = lambda i: (0,) * len(block_shape)
    if single_buffer:
        return pl.BlockSpec(block_shape, index_map, pipeline_mode=pl.Buffered(1))
    return pl.BlockSpec(block_shape, index_map)


def mixnet_kernel(scales_ref, x_ref, w_ref, b_ref, o_ref, *, b1, b2, b3):
    """Fused QuantIdentity x2 -> add -> QuantIdentity -> integer matmul -> scale+bias.

    scales_ref (SMEM, (6,)) = [1/s1, 1/s2, s1, s2, 1/s3, s3*s_w].
    w_ref holds the transposed integer weight codes (exact in bf16), so the
    MXU multiplies exact small integers with f32 accumulation; the single
    per-tensor dequant scale is applied to the accumulator, fused with the bias.
    """
    x = x_ref[...]
    # QuantIdentity #1 (n_bits) and #2 (n_bits + 1): integer codes only.
    r1 = jnp.clip(jnp.round(x * scales_ref[0]), b1[0], b1[1])
    r2 = jnp.clip(jnp.round(x * scales_ref[1]), b2[0], b2[1])
    # QuantIdentity #3 (n_bits) on the dequantized sum (bit-exact with the
    # module: dequant with s1/s2, then requant with 1/s3).
    r3 = jnp.clip(
        jnp.round((r1 * scales_ref[2] + r2 * scales_ref[3]) * scales_ref[4]),
        b3[0], b3[1])
    # Exact integer matmul on the MXU (bf16 operands hold the ints exactly).
    acc = jnp.dot(r3.astype(jnp.bfloat16), w_ref[...],
                  preferred_element_type=jnp.float32)
    # Single fused dequant (s3 * s_w) + bias add + store.
    o_ref[...] = (acc * scales_ref[5] + b_ref[...]).astype(o_ref.dtype)


def prepare_params(w, bias, act_scales, n_bits):
    """One-time parameter prep (kept OUT of the per-call hot path)."""
    assert n_bits <= 8, "integer codes must be exactly representable in bf16"
    out_f, in_f = w.shape
    lo, hi = _signed_bounds(n_bits)
    w32 = jnp.asarray(w, jnp.float32)
    # Epsilon guard against an all-zero weight (NaN/Inf-free).
    s_w = jnp.maximum(jnp.max(jnp.abs(w32)) / hi, 1e-12)
    w_int = jnp.clip(jnp.round(w32 / s_w), lo, hi)          # exact integer codes
    w_t = w_int.T.astype(jnp.bfloat16)                       # (in_f, out_f), exact
    b_row = jnp.asarray(bias, jnp.float32).reshape(1, out_f)
    s1, s2, s3 = (jnp.asarray(s, jnp.float32) for s in act_scales)
    scales = jnp.stack([1.0 / s1, 1.0 / s2, s1, s2, 1.0 / s3, s3 * s_w])
    return {"w_t": w_t, "bias": b_row, "scales": scales}


def mixnet_forward(x, params, *, n_bits, tm_max=1024):
    w_t, b_row, scales = params["w_t"], params["bias"], params["scales"]
    K, N = w_t.shape
    B, F = x.shape
    assert F == K, (F, K)

    # ---- generation-aware VMEM budgeting --------------------------------
    cap = _vmem_capacity_bytes()
    vmem_limit = max(int(cap * 0.75), 32 * 1024 * 1024)
    w_bytes = K * N * 2
    single_buffer_w = w_bytes > (2 << 20)        # only worth it for big weights
    w_bufs = 1 if single_buffer_w else 2
    budget = int(cap * 0.70)
    per_row = 2 * 4 * (K + N)                    # double-buffered f32 x + out rows
    avail = budget - w_bufs * w_bytes - 2 * N * 4
    tm_fit = (avail // per_row) // 8 * 8 if avail > 0 else 8
    tm_cap = max(8, min(tm_max, tm_fit))
    # TODO(synk): if the weight alone blows the budget, N/K tiling is required.

    # ---- batch tiling: minimal padding, >= 2 steps when possible --------
    if B < 16:
        TM, n_steps, Bp = B, 1, B                # full-extent batch block, no pad
    else:
        B8 = _round_up(B, 8)
        min_steps = max(2, -(-B8 // tm_cap))     # >=2 steps -> both TCs busy (v7x)
        max_steps = B8 // 8
        best = None
        for n in range(min_steps, max_steps + 1):
            tm = _round_up(-(-B8 // n), 8)
            if tm > tm_cap:
                continue
            bp = tm * n
            if best is None or (bp, n) < (best[2], best[1]):
                best = (tm, n, bp)
        TM, n_steps, Bp = best

    x_in = x.astype(jnp.float32)
    if Bp != B:
        x_in = jnp.pad(x_in, ((0, Bp - B), (0, 0)))

    b1 = _signed_bounds(n_bits)
    b2 = _signed_bounds(n_bits + 1)
    kernel = functools.partial(mixnet_kernel, b1=b1, b2=b2, b3=b1)

    flops = 2 * Bp * K * N + 10 * Bp * K + 3 * Bp * N
    bytes_accessed = Bp * K * 4 + w_bytes + N * 4 + Bp * N * 4 + scales.size * 4

    out = pl.pallas_call(
        kernel,
        out_shape=jax.ShapeDtypeStruct((Bp, N), jnp.float32),
        grid=(n_steps,),
        in_specs=[
            pl.BlockSpec(memory_space=pltpu.SMEM),          # (6,) packed scales
            pl.BlockSpec((TM, K), lambda i: (i, 0)),        # x batch tile
            _resident_spec((K, N), single_buffer_w),        # integer weight codes
            _resident_spec((1, N), single_buffer_w),        # bias row
        ],
        out_specs=pl.BlockSpec((TM, N), lambda i: (i, 0)),
        compiler_params=pltpu.CompilerParams(
            dimension_semantics=("parallel",),
            vmem_limit_bytes=vmem_limit),
        cost_estimate=pl.CostEstimate(
            flops=flops, transcendentals=0, bytes_accessed=bytes_accessed),
    )(scales, x_in, w_t, b_row)

    return out if Bp == B else out[:B]


def reference_forward(x, w, bias, act_scales, n_bits):
    """Pure-JAX f32 mirror of the module forward (use_conv=False)."""
    s1, s2, s3 = act_scales
    q1 = _fake_quant_act(x, s1, n_bits)
    q2 = _fake_quant_act(x, s2, n_bits + 1)
    q3 = _fake_quant_act(q1 + q2, s3, n_bits)
    lo, hi = _signed_bounds(n_bits)
    s_w = jnp.maximum(jnp.max(jnp.abs(w)) / hi, 1e-12)
    w_q = jnp.clip(jnp.round(w / s_w), lo, hi) * s_w
    return q3 @ w_q.T + bias[None, :]


if __name__ == "__main__":
    key = jax.random.PRNGKey(0)
    k_x, k_w, k_b = jax.random.split(key, 3)

    batch, inp_size, n_bits = 8, 32, 4               # use_conv=False path
    x = jax.random.normal(k_x, (batch, inp_size), jnp.float32)

    # QuantLinear(inp_size, inp_size, bias=True) params, PyTorch default init.
    bound = 1.0 / (inp_size ** 0.5)
    w = jax.random.uniform(k_w, (inp_size, inp_size), jnp.float32, -bound, bound)
    bias = jax.random.uniform(k_b, (inp_size,), jnp.float32, -bound, bound)

    # Deterministic "calibrated" per-tensor scales for the three QuantIdentity
    # quantizers (Brevitas learns these during QAT; here they are constants).
    _, h1 = _signed_bounds(n_bits)
    _, h2 = _signed_bounds(n_bits + 1)
    amax = jnp.max(jnp.abs(x))
    s1 = amax / h1
    s2 = amax / h2
    s3 = jnp.max(jnp.abs(_fake_quant_act(x, s1, n_bits)
                         + _fake_quant_act(x, s2, n_bits + 1))) / h1
    act_scales = (s1, s2, s3)

    params = prepare_params(w, bias, act_scales, n_bits)
    out = mixnet_forward(x, params, n_bits=n_bits)
    out = jax.block_until_ready(out)

    ref = reference_forward(x, w, bias, act_scales, n_bits)
    assert out.shape == (batch, inp_size)
    assert jnp.allclose(out, ref, atol=1e-4, rtol=1e-4), \
        float(jnp.max(jnp.abs(out - ref)))

    print("KERNEL_OK")
</pallas_src>

<mosaic_0001>
module attributes {stable_mosaic.version = 11 : i64} {
  func.func @mixnet_kernel(%arg0: i32, %arg1: memref<6xf32, #tpu.memory_space<smem>>, %arg2: memref<8x32xf32, #tpu.memory_space<vmem>>, %arg3: memref<32x32xbf16, #tpu.memory_space<vmem>>, %arg4: memref<1x32xf32, #tpu.memory_space<vmem>>, %arg5: memref<8x32xf32, #tpu.memory_space<vmem>>) attributes {dimension_semantics = [#tpu.dimension_semantics<parallel>], iteration_bounds = array<i64: 1>, scalar_prefetch = 0 : i64, scratch_operands = 0 : i64, tpu.core_type = #tpu.core_type<tc>, window_params = [{transform_indices = @transform_0, window_bounds = array<i64: 6>}, {transform_indices = @transform_1, window_bounds = array<i64: 8, 32>}, {pipeline_mode = #tpu.pipeline_mode<synchronous>, transform_indices = @transform_2, window_bounds = array<i64: 32, 32>}, {pipeline_mode = #tpu.pipeline_mode<synchronous>, transform_indices = @transform_3, window_bounds = array<i64: 1, 32>}, {transform_indices = @transform_4, window_bounds = array<i64: 8, 32>}]} {
    %c0 = arith.constant 0 : index
    %c0_0 = arith.constant 0 : index
    %0 = vector.load %arg2[%c0, %c0_0] : memref<8x32xf32, #tpu.memory_space<vmem>>, vector<8x32xf32>
    %c0_1 = arith.constant 0 : index
    %1 = memref.load %arg1[%c0_1] : memref<6xf32, #tpu.memory_space<smem>>
    %2 = vector.broadcast %1 : f32 to vector<8x32xf32>
    %3 = arith.mulf %0, %2 : vector<8x32xf32>
    %4 = math.roundeven %3 : vector<8x32xf32>
    %cst = arith.constant -8.000000e+00 : f32
    %cst_2 = arith.constant 7.000000e+00 : f32
    %5 = vector.broadcast %cst : f32 to vector<8x32xf32>
    %6 = arith.maximumf %5, %4 : vector<8x32xf32>
    %7 = vector.broadcast %cst_2 : f32 to vector<8x32xf32>
    %8 = arith.minimumf %7, %6 : vector<8x32xf32>
    %c1 = arith.constant 1 : index
    %9 = memref.load %arg1[%c1] : memref<6xf32, #tpu.memory_space<smem>>
    %10 = vector.broadcast %9 : f32 to vector<8x32xf32>
    %11 = arith.mulf %0, %10 : vector<8x32xf32>
    %12 = math.roundeven %11 : vector<8x32xf32>
    %cst_3 = arith.constant -1.600000e+01 : f32
    %cst_4 = arith.constant 1.500000e+01 : f32
    %13 = vector.broadcast %cst_3 : f32 to vector<8x32xf32>
    %14 = arith.maximumf %13, %12 : vector<8x32xf32>
    %15 = vector.broadcast %cst_4 : f32 to vector<8x32xf32>
    %16 = arith.minimumf %15, %14 : vector<8x32xf32>
    %c2 = arith.constant 2 : index
    %17 = memref.load %arg1[%c2] : memref<6xf32, #tpu.memory_space<smem>>
    %18 = vector.broadcast %17 : f32 to vector<8x32xf32>
    %19 = arith.mulf %8, %18 : vector<8x32xf32>
    %c3 = arith.constant 3 : index
    %20 = memref.load %arg1[%c3] : memref<6xf32, #tpu.memory_space<smem>>
    %21 = vector.broadcast %20 : f32 to vector<8x32xf32>
    %22 = arith.mulf %16, %21 : vector<8x32xf32>
    %23 = arith.addf %19, %22 : vector<8x32xf32>
    %c4 = arith.constant 4 : index
    %24 = memref.load %arg1[%c4] : memref<6xf32, #tpu.memory_space<smem>>
    %25 = vector.broadcast %24 : f32 to vector<8x32xf32>
    %26 = arith.mulf %23, %25 : vector<8x32xf32>
    %27 = math.roundeven %26 : vector<8x32xf32>
    %cst_5 = arith.constant -8.000000e+00 : f32
    %cst_6 = arith.constant 7.000000e+00 : f32
    %28 = vector.broadcast %cst_5 : f32 to vector<8x32xf32>
    %29 = arith.maximumf %28, %27 : vector<8x32xf32>
    %30 = vector.broadcast %cst_6 : f32 to vector<8x32xf32>
    %31 = arith.minimumf %30, %29 : vector<8x32xf32>
    %32 = arith.truncf %31 : vector<8x32xf32> to vector<8x32xbf16>
    %c0_7 = arith.constant 0 : index
    %c0_8 = arith.constant 0 : index
    %33 = vector.load %arg3[%c0_7, %c0_8] : memref<32x32xbf16, #tpu.memory_space<vmem>>, vector<32x32xbf16>
    %cst_9 = arith.constant dense<0.000000e+00> : vector<8x32xf32>
    %34 = tpu.matmul %32, %33, %cst_9 {dimension_numbers = #tpu.dot_dimension_numbers<[1], [0], [0], [1], [0, 0, 1, 1], [], []>} : vector<8x32xbf16>, vector<32x32xbf16>, vector<8x32xf32> -> vector<8x32xf32>
    %c5 = arith.constant 5 : index
    %35 = memref.load %arg1[%c5] : memref<6xf32, #tpu.memory_space<smem>>
    %36 = vector.broadcast %35 : f32 to vector<8x32xf32>
    %37 = arith.mulf %34, %36 : vector<8x32xf32>
    %c0_10 = arith.constant 0 : index
    %c0_11 = arith.constant 0 : index
    %38 = vector.load %arg4[%c0_10, %c0_11] : memref<1x32xf32, #tpu.memory_space<vmem>>, vector<1x32xf32>
    %39 = vector.broadcast %38 : vector<1x32xf32> to vector<8x32xf32>
    %40 = arith.addf %37, %39 : vector<8x32xf32>
    %c0_12 = arith.constant 0 : index
    %c0_13 = arith.constant 0 : index
    %41 = vector.load %arg5[%c0_12, %c0_13] : memref<8x32xf32, #tpu.memory_space<vmem>>, vector<8x32xf32>
    tpu.vector_store %arg5[%c0_12, %c0_13], %40 {strides = array<i32>} : memref<8x32xf32, #tpu.memory_space<vmem>>, vector<8x32xf32>,
    return
  }
  func.func @transform_0(%arg0: i32) -> i32 {
    %c0_i32 = arith.constant 0 : i32
    %c0_i32_0 = arith.constant 0 : i32
    return %c0_i32 : i32
  }
  func.func @transform_1(%arg0: i32) -> (i32, i32) {
    %c0_i32 = arith.constant 0 : i32
    %c0_i32_0 = arith.constant 0 : i32
    return %arg0, %c0_i32 : i32, i32
  }
  func.func @transform_2(%arg0: i32) -> (i32, i32) {
    %c0_i32 = arith.constant 0 : i32
    %c0_i32_0 = arith.constant 0 : i32
    %c0_i32_1 = arith.constant 0 : i32
    return %c0_i32, %c0_i32_0 : i32, i32
  }
  func.func @transform_3(%arg0: i32) -> (i32, i32) {
    %c0_i32 = arith.constant 0 : i32
    %c0_i32_0 = arith.constant 0 : i32
    %c0_i32_1 = arith.constant 0 : i32
    return %c0_i32, %c0_i32_0 : i32, i32
  }
  func.func @transform_4(%arg0: i32) -> (i32, i32) {
    %c0_i32 = arith.constant 0 : i32
    %c0_i32_0 = arith.constant 0 : i32
    return %arg0, %c0_i32 : i32, i32
  }
}

</mosaic_0001>

<llo_original>
// kernel: tpu_custom_call.1
$region0: #{tpu_custom_call.1}
  #allocation0 [shape = 'u32[]', space=smem, size = 0x4, offset = 0x4, fixed_abs, tag = 'smem constant byte address 0x4 - core index']
  #allocation1 [shape = 'u32[144,128]{1,0:T(1,128)}', space=vmem, size = 0x12000, scoped, tag = 'internal scratch']
  %s0 = inlined_call_operand.hbm [shape: f32[6], index: 0, kind: input, shape index: {}]
  %s1 = inlined_call_operand.hbm [shape: f32[8,32], index: 1, kind: input, shape index: {}]
  %s2 = inlined_call_operand.hbm [shape: bf16[32,32], index: 2, kind: input, shape index: {}]
  %s3 = inlined_call_operand.vmem [shape: f32[1,32], index: 3, kind: input, shape index: {}]
  %s4 = inlined_call_operand.hbm [shape: f32[8,32], index: 4, kind: output, shape index: {}]
  %s5 = sld [smem:[#allocation0]]
  $region38: #{tpu_custom_call.1} parent=0
    _
  %s7 = ssub.s32 1, %s5
  %s8 = scalar_select 0, %s7, %s5
  $region1: #{tpu_custom_call.1} parent=0
    #allocation2 [shape = 'u8[512]{0}', space=smem, size = 0x200, scoped, tag = 'input window, operand 0, single buffered']
    #allocation3 [shape = 's32[1]{0}', space=sflag, size = 0x4, scoped, tag = 'scoped memory for tpu_custom_call.1']
    #allocation4 [shape = 's32[1]{0}', space=sflag, size = 0x4, scoped, tag = 'scoped memory for tpu_custom_call.1']
    #allocation5 [shape = 's32[1]{0}', space=sflag, size = 0x4, scoped, tag = 'scoped memory for tpu_custom_call.1']
    #allocation6 [shape = 'u8[4096]{0}', space=vmem, size = 0x1000, scoped, tag = 'input window, operand 1, single buffered']
    #allocation7 [shape = 'u8[8192]{0}', space=vmem, size = 0x2000, scoped, tag = 'input window, operand 2, single buffered']
    #allocation8 [shape = 's32[1]{0}', space=sflag, size = 0x4, scoped, tag = 'scoped memory for tpu_custom_call.1']
    #allocation9 [shape = 'u8[4096]{0}', space=vmem, size = 0x1000, scoped, tag = 'output window, operand 0, single buffered']
    %9 = vsyncpa [#allocation5], 0
    %10 = vsyncpa [#allocation3], 0
    %11 = vsyncpa [#allocation8], 0
    %12 = vsyncpa [#allocation4], 0
    // Predicated region
    $region2: #{tpu_custom_call.1} parent=1 // pred_check
      _
    $region3: #{tpu_custom_call.1} parent=1 // pred_check_branch
      %14 = sbr.rel (0) target = $region5
    $region4: #{tpu_custom_call.1} parent=1 // pred_region
      %s16 = ssub.s32 16, 16
      %17 = vsyncadd [#allocation5], %s16
      %20 = dma.hbm_to_smem %s0, 16, [#allocation2], [#allocation5]
    $region5: #{tpu_custom_call.1} parent=1 // pred_fallthru
      _
    // Predicated region
    $region6: #{tpu_custom_call.1} parent=1 // pred_check
      _
    $region7: #{tpu_custom_call.1} parent=1 // pred_check_branch
      %22 = sbr.rel (0) target = $region9
    $region8: #{tpu_custom_call.1} parent=1 // pred_region
      %s24 = ssub.s32 128, 128
      %25 = vsyncadd [#allocation3], %s24
      %s27 = sshll.u32 [#allocation6], 4
      %s28 = int_to_ptr.vmem [resolvable:$true] %s27
      %30 = dma.hbm_to_vmem [thread:$0]  %s1, 128, %s28, [#allocation3]
    $region9: #{tpu_custom_call.1} parent=1 // pred_fallthru
      _
    // Predicated region
    $region10: #{tpu_custom_call.1} parent=1 // pred_check
      _
    $region11: #{tpu_custom_call.1} parent=1 // pred_check_branch
      %32 = sbr.rel (0) target = $region13
    $region12: #{tpu_custom_call.1} parent=1 // pred_region
      %s34 = ssub.s32 256, 256
      %35 = vsyncadd [#allocation8], %s34
      %s36 = sshll.u32 [#allocation7], 4
      %s37 = int_to_ptr.vmem [resolvable:$true] %s36
      %42 = dma.hbm_to_vmem [thread:$0]  %s2, 256, %s37, [#allocation8], 64, 64, 4
    $region13: #{tpu_custom_call.1} parent=1 // pred_fallthru
      _
    // Predicated region
    $region14: #{tpu_custom_call.1} parent=1 // pred_check
      _
    $region15: #{tpu_custom_call.1} parent=1 // pred_check_branch
      %44 = sbr.rel (0) target = $region17
    $region16: #{tpu_custom_call.1} parent=1 // pred_region
      _
    $region17: #{tpu_custom_call.1} parent=1 // pred_fallthru
      _
    // Predicated region
    $region18: #{tpu_custom_call.1} parent=1 // pred_check
      _
    $region19: #{tpu_custom_call.1} parent=1 // pred_check_branch
      %46 = sbr.rel (0) target = $region21
    $region20: #{tpu_custom_call.1} parent=1 // pred_region
      %47 = dma.done [#allocation5], 16
    $region21: #{tpu_custom_call.1} parent=1 // pred_fallthru
      _
    // Predicated region
    $region22: #{tpu_custom_call.1} parent=1 // pred_check
      _
    $region23: #{tpu_custom_call.1} parent=1 // pred_check_branch
      %49 = sbr.rel (0) target = $region25
    $region24: #{tpu_custom_call.1} parent=1 // pred_region
      %50 = dma.done [#allocation3], 128
    $region25: #{tpu_custom_call.1} parent=1 // pred_fallthru
      _
    // Predicated region
    $region26: #{tpu_custom_call.1} parent=1 // pred_check
      _
    $region27: #{tpu_custom_call.1} parent=1 // pred_check_branch
      %52 = sbr.rel (0) target = $region29
    $region28: #{tpu_custom_call.1} parent=1 // pred_region
      %53 = dma.done [#allocation8], 256
    $region29: #{tpu_custom_call.1} parent=1 // pred_fallthru
      _
    %54 = sfence
    %v56 = vld [vmem:[#allocation6] sm:$0xff]
    %s57 = sld [smem:[#allocation2]]
    %v58 = vstv %s57
    %v59 = vmul.f32 %v56, %v58
    %v60 = vround.ne.pseudo %v59
    %v61 = vmax.f32 %v60, -8.0
    %v62 = vmin.f32 %v61, 7.0
    %s63 = sld [smem:[#allocation2 + $0x1]]
    %v64 = vstv %s63
    %v65 = vmul.f32 %v56, %v64
    %v66 = vround.ne.pseudo %v65
    %v67 = vmax.f32 %v66, -16.0
    %v68 = vmin.f32 %v67, 15.0
    %s69 = sld [smem:[#allocation2 + $0x2]]
    %v70 = vstv %s69
    %v71 = vmul.f32 %v62, %v70
    %s72 = sld [smem:[#allocation2 + $0x3]]
    %v73 = vstv %s72
    %v74 = vmul.f32 %v68, %v73
    %v75 = vadd.f32 %v71, %v74
    %s76 = sld [smem:[#allocation2 + $0x4]]
    %v77 = vstv %s76
    %v78 = vmul.f32 %v75, %v77
    %v79 = vround.ne.pseudo %v78
    %v80 = vmax.f32 %v79, -8.0
    %v81 = vmin.f32 %v80, 7.0
    %v82 = vpack.c.bf16 %v81, %v81
    %v83 = vld [vmem:[#allocation7] sm:$0xf]
    %v84 = vld [vmem:[#allocation7 + $0x4] sm:$0xf]
    %v85 = vld [vmem:[#allocation7 + $0x8] sm:$0xf]
    %v86 = vld [vmem:[#allocation7 + $0xc] sm:$0xf]
    %v91 = vunpack.c.l.b16 %v83
    %v92 = vunpack.c.l.b16 %v84
    %v93 = vunpack.c.l.b16 %v85
    %v94 = vunpack.c.l.b16 %v86
    %v95 = vpack.c.b16 %v92, %v91
    %v96 = vpack.c.b16 %v94, %v93
    %vm99 = vcmask 261120
    %v101 = vsel %vm99, %v82, 0
    %103 = vmatprep.subr.bf16.mxu0 0
    %104 = vmatpush1.bf16.msra.mxu0 %v95
    %105 = vmatprep.subr.bf16.mxu0 0
    %106 = vmatpush1.bf16.msra.mxu0 %v96
    %107 = vmatprep.subr.bf16.mxu0 0
    %108 = vmatpush1.bf16.msra.mxu0 0
    %109 = vmatprep.subr.bf16.mxu0 0
    %110 = vmatpush1.bf16.msra.mxu0 0
    %111 = vmatprep.subr.bf16.mxu0 0
    %112 = vmatpush1.bf16.msra.mxu0 0
    %113 = vmatprep.subr.bf16.mxu0 0
    %114 = vmatpush1.bf16.msra.mxu0 0
    %115 = vmatprep.subr.bf16.mxu0 0
    %116 = vmatpush1.bf16.msra.mxu0 0
    %117 = vmatprep.subr.bf16.mxu0 0
    %118 = vmatpush1.bf16.msra.mxu0 0
    %119 = vmatprep.subr.bf16.mxu0 0
    %120 = vmatpush1.bf16.msra.mxu0 0
    %121 = vmatprep.subr.bf16.mxu0 0
    %122 = vmatpush1.bf16.msra.mxu0 0
    %123 = vmatprep.subr.bf16.mxu0 0
    %124 = vmatpush1.bf16.msra.mxu0 0
    %125 = vmatprep.subr.bf16.mxu0 0
    %126 = vmatpush1.bf16.msra.mxu0 0
    %127 = vmatprep.subr.bf16.mxu0 0
    %128 = vmatpush1.bf16.msra.mxu0 0
    %129 = vmatprep.subr.bf16.mxu0 0
    %130 = vmatpush1.bf16.msra.mxu0 0
    %131 = vmatprep.subr.bf16.mxu0 0
    %132 = vmatpush1.bf16.msra.mxu0 0
    %133 = vmatprep.subr.bf16.mxu0 0
    %134 = vmatpush1.bf16.msra.mxu0 0
    %135 = vmatprep.mubr.bf16.mxu0 0
    %136 = vmatmul.mubr.bf16.gmra.mrb[0].mxu0 %v101
    %v137 = vpop.f32.mrb[0].mxu0
    %v138 = vadd.f32 0.0, %v137
    %v139 = vpop.f32.mrb[0].mxu0
    %v140 = vpop.f32.mrb[0].mxu0
    %v141 = vpop.f32.mrb[0].mxu0
    %142 = vdwg.mxu0
    %s143 = sld [smem:[#allocation2 + $0x5]]
    %v144 = vstv %s143
    %v145 = vmul.f32 %v138, %v144
    %v146 = vld [vmem:[%s3] sm:$0x1]
    %v148 = vlaneseq
    %v149 = vshrl.u32 %v148, 7
    %v150 = vsub.s32 0, %v149
    %v151 = vrot.slane %v146, %v150
    %v153 = vadd.f32 %v145, %v151
    %154 = vst.msk [vmem:[#allocation9] sm:$0xff] %vm99, %v153
    // Predicated region
    $region30: #{tpu_custom_call.1} parent=1 // pred_check
      _
    $region31: #{tpu_custom_call.1} parent=1 // pred_check_branch
      %156 = sbr.rel (0) target = $region33
    $region32: #{tpu_custom_call.1} parent=1 // pred_region
      %s158 = ssub.s32 128, 128
      %159 = vsyncadd [#allocation4], %s158
      %s161 = sshll.u32 [#allocation9], 4
      %s162 = int_to_ptr.vmem [resolvable:$true] %s161
      %164 = dma.vmem_to_hbm [thread:$0]  %s162, 128, %s4, [#allocation4]
    $region33: #{tpu_custom_call.1} parent=1 // pred_fallthru
      _
    // Predicated region
    $region34: #{tpu_custom_call.1} parent=1 // pred_check
      _
    $region35: #{tpu_custom_call.1} parent=1 // pred_check_branch
      %166 = sbr.rel (0) target = $region37
    $region36: #{tpu_custom_call.1} parent=1 // pred_region
      %167 = dma.done [#allocation4], 128
    $region37: #{tpu_custom_call.1} parent=1 // pred_fallthru
      _
    %168 = vsyncpa [#allocation3], 1
    %169 = vsyncpa [#allocation8], 1
    %170 = vsyncpa [#allocation4], 1
    %171 = vsyncpa [#allocation5], 1

</llo_original>
